<compile_context>
chip_gen: v6e
topology: v6e:2x2x1
jax: 0.10.0
libtpu: 0.0.40
codegen_flags: <defaults>
</compile_context>

<pallas_src>
import functools

import jax
import jax.numpy as jnp
from jax.experimental import pallas as pl
from jax.experimental.pallas import tpu as pltpu

EPS = 1e-5


def _pick_tile_h(H, W, C, target_bytes=1 << 20):
    """Largest divisor of H whose f32 tile fits target_bytes; force >=2 tiles."""
    divisors = [d for d in range(1, H + 1) if H % d == 0]
    fitting = [d for d in divisors if d * W * C * 4 <= target_bytes]
    th = max(fitting) if fitting else 1
    if th == H and len(divisors) > 1:
        th = max(d for d in divisors if d < H)   # keep pipeline depth >= 2 per image
    return th


def _resnet_block_kernel(x_main_ref, x_top_ref, x_bot_ref, w_ref,
                         o_ref, stats_ref, *, n_pixels):
    # x_main_ref: (1, TH, W, C) f32  -- tile rows (also the residual branch)
    # x_top_ref : (1, 1,  W, C) f32  -- row above tile (reflected at image top)
    # x_bot_ref : (1, 1,  W, C) f32  -- row below tile (reflected at image bottom)
    # w_ref     : (9*C, C)  bf16     -- im2col conv weights, (dy, dx, cin) x cout
    # o_ref     : (1, TH, W, C) f32
    # stats_ref : (2, C) f32 VMEM scratch -- running [sum, sum_sq] per channel
    p = pl.program_id(1)    # 0: stats pass, 1: normalize + write pass
    th = pl.program_id(2)

    TH, W, C = x_main_ref.shape[1], x_main_ref.shape[2], x_main_ref.shape[3]

    # Assemble the halo'd tile and cast to bf16 once (MXU operand dtype); the f32
    # residual is read separately from x_main_ref in pass 1.
    rows = jnp.concatenate(
        [x_top_ref[0].astype(jnp.bfloat16),
         x_main_ref[0].astype(jnp.bfloat16),
         x_bot_ref[0].astype(jnp.bfloat16)], axis=0)                  # (TH+2, W, C)
    # W reflection: padded col -1 == col 1, padded col W == col W-2.
    xpad = jnp.concatenate(
        [rows[:, 1:2, :], rows, rows[:, W - 2:W - 1, :]], axis=1)     # (TH+2, W+2, C)

    # im2col: one deep-K MXU matmul, bf16 operands, f32 accumulation.
    taps = [xpad[dy:dy + TH, dx:dx + W, :]
            for dy in range(3) for dx in range(3)]
    patch = jnp.concatenate(taps, axis=-1).reshape(TH * W, 9 * C)     # bf16
    acc = jnp.dot(patch, w_ref[...],
                  preferred_element_type=jnp.float32)                 # (TH*W, C) f32

    @pl.when(jnp.logical_and(p == 0, th == 0))
    def _():
        stats_ref[...] = jnp.zeros_like(stats_ref)

    @pl.when(p == 0)
    def _():
        stats_ref[0:1, :] = stats_ref[0:1, :] + jnp.sum(acc, axis=0, keepdims=True)
        stats_ref[1:2, :] = stats_ref[1:2, :] + jnp.sum(jnp.square(acc), axis=0,
                                                        keepdims=True)

    @pl.when(p == 1)
    def _():
        inv_n = 1.0 / float(n_pixels)
        mean = stats_ref[0:1, :] * inv_n                   # (1, C)
        var = stats_ref[1:2, :] * inv_n - jnp.square(mean)  # biased variance
        inv_std = jax.lax.rsqrt(var + EPS)                 # EUP rsqrt
        normed = (acc - mean) * inv_std                    # (TH*W, C)
        o_ref[0] = (x_main_ref[0] + normed.reshape(TH, W, C)).astype(o_ref.dtype)


@jax.jit
def resnet_block_forward(x_nchw, w_oihw, bias=None):
    """x_nchw: (N, C, H, W) f32; w_oihw: (C, C, 3, 3); bias ignored (cancels
    exactly under affine=False InstanceNorm mean subtraction)."""
    del bias
    x = jnp.transpose(x_nchw, (0, 2, 3, 1))                # NCHW -> NHWC (glue)
    N, H, W, C = x.shape

    TH = _pick_tile_h(H, W, C)
    n_th = H // TH

    # im2col weight layout ((dy, dx, cin), cout), bf16 for the MXU.
    w_bf16 = jnp.transpose(w_oihw, (2, 3, 1, 0)).reshape(9 * C, C).astype(jnp.bfloat16)

    kernel = functools.partial(_resnet_block_kernel, n_pixels=H * W)

    def main_map(n, p, th):
        return (n, th, 0, 0)

    def top_map(n, p, th):       # reflected row above the tile
        return (n, jnp.where(th == 0, 1, th * TH - 1), 0, 0)

    def bot_map(n, p, th):       # reflected row below the tile
        return (n, jnp.where(th == n_th - 1, H - 2, (th + 1) * TH), 0, 0)

    def out_map(n, p, th):
        # During the stats pass (p == 0) stay parked on block (n, 0): no
        # unwritten buffer ever gets flushed to HBM; real writes happen at p == 1.
        return (n, th * p, 0, 0)

    out_nhwc = pl.pallas_call(
        kernel,
        out_shape=jax.ShapeDtypeStruct((N, H, W, C), x.dtype),
        grid_spec=pltpu.PrefetchScalarGridSpec(
            num_scalar_prefetch=0,
            grid=(N, 2, n_th),
            in_specs=[
                pl.BlockSpec((1, TH, W, C), main_map),
                pl.BlockSpec((1, 1, W, C), top_map),
                pl.BlockSpec((1, 1, W, C), bot_map),
                pl.BlockSpec((9 * C, C), lambda n, p, th: (0, 0)),
            ],
            out_specs=pl.BlockSpec((1, TH, W, C), out_map),
            scratch_shapes=[pltpu.VMEM((2, C), jnp.float32)],
        ),
        compiler_params=pltpu.CompilerParams(
            dimension_semantics=("parallel", "arbitrary", "arbitrary"),
            vmem_limit_bytes=32 * 1024 * 1024),
    )(x, x, x, w_bf16)

    return jnp.transpose(out_nhwc, (0, 3, 1, 2))           # NHWC -> NCHW


@jax.jit
def resnet_block_reference(x_nchw, w_oihw, bias):
    """Pure-JAX f32 reference of the module forward (NCHW)."""
    xp = jnp.pad(x_nchw, ((0, 0), (0, 0), (1, 1), (1, 1)), mode="reflect")
    y = jax.lax.conv_general_dilated(
        xp, w_oihw, window_strides=(1, 1), padding="VALID",
        dimension_numbers=("NCHW", "OIHW", "NCHW"))
    y = y + bias[None, :, None, None]
    mean = jnp.mean(y, axis=(2, 3), keepdims=True)
    var = jnp.mean((y - mean) ** 2, axis=(2, 3), keepdims=True)
    y = (y - mean) / jnp.sqrt(var + EPS)
    return x_nchw + y


if __name__ == "__main__":
    N, C, H, W = 2, 4, 16, 16

    key = jax.random.PRNGKey(0)
    kx, kw, kb = jax.random.split(key, 3)
    x = jax.random.normal(kx, (N, C, H, W), dtype=jnp.float32)
    # Deterministic synthetic Conv2d(dim, dim, 3, bias=True) parameters.
    fan_in = C * 3 * 3
    bound = 1.0 / (fan_in ** 0.5)
    w = jax.random.uniform(kw, (C, C, 3, 3), jnp.float32, -bound, bound)
    b = jax.random.uniform(kb, (C,), jnp.float32, -bound, bound)

    out = jax.block_until_ready(resnet_block_forward(x, w, b))
    ref = jax.block_until_ready(resnet_block_reference(x, w, b))

    assert out.shape == (N, C, H, W), out.shape
    max_err = float(jnp.max(jnp.abs(out - ref)))
    # bf16 MXU operands -> expect ~1e-2-level absolute error vs the f32 reference.
    assert max_err < 5e-2, max_err

    print("KERNEL_OK")
</pallas_src>

<mosaic_0001>
module attributes {stable_mosaic.version = 11 : i64} {
  func.func @_resnet_block_kernel(%arg0: i32, %arg1: i32, %arg2: i32, %arg3: memref<1x8x16x4xf32, #tpu.memory_space<vmem>>, %arg4: memref<1x1x16x4xf32, #tpu.memory_space<vmem>>, %arg5: memref<1x1x16x4xf32, #tpu.memory_space<vmem>>, %arg6: memref<36x4xbf16, #tpu.memory_space<vmem>>, %arg7: memref<1x8x16x4xf32, #tpu.memory_space<vmem>>, %arg8: memref<2x4xf32, #tpu.memory_space<vmem>>) attributes {dimension_semantics = [#tpu.dimension_semantics<parallel>, #tpu.dimension_semantics<arbitrary>, #tpu.dimension_semantics<arbitrary>], iteration_bounds = array<i64: 2, 2, 2>, scalar_prefetch = 0 : i64, scratch_operands = 1 : i64, tpu.core_type = #tpu.core_type<tc>, window_params = [{transform_indices = @transform_0, window_bounds = array<i64: 1, 8, 16, 4>}, {transform_indices = @transform_1, window_bounds = array<i64: 1, 1, 16, 4>}, {transform_indices = @transform_2, window_bounds = array<i64: 1, 1, 16, 4>}, {pipeline_mode = #tpu.pipeline_mode<synchronous>, transform_indices = @transform_3, window_bounds = array<i64: 36, 4>}, {transform_indices = @transform_4, window_bounds = array<i64: 1, 8, 16, 4>}]} {
    %c0 = arith.constant 0 : index
    %c0_0 = arith.constant 0 : index
    %c0_1 = arith.constant 0 : index
    %c0_2 = arith.constant 0 : index
    %0 = vector.load %arg4[%c0, %c0_0, %c0_1, %c0_2] : memref<1x1x16x4xf32, #tpu.memory_space<vmem>>, vector<1x1x16x4xf32>
    %1 = vector.shape_cast %0 : vector<1x1x16x4xf32> to vector<1x16x4xf32>
    %2 = arith.truncf %1 : vector<1x16x4xf32> to vector<1x16x4xbf16>
    %c0_3 = arith.constant 0 : index
    %c0_4 = arith.constant 0 : index
    %c0_5 = arith.constant 0 : index
    %c0_6 = arith.constant 0 : index
    %3 = vector.load %arg3[%c0_3, %c0_4, %c0_5, %c0_6] : memref<1x8x16x4xf32, #tpu.memory_space<vmem>>, vector<1x8x16x4xf32>
    %4 = vector.shape_cast %3 : vector<1x8x16x4xf32> to vector<8x16x4xf32>
    %5 = arith.truncf %4 : vector<8x16x4xf32> to vector<8x16x4xbf16>
    %c0_7 = arith.constant 0 : index
    %c0_8 = arith.constant 0 : index
    %c0_9 = arith.constant 0 : index
    %c0_10 = arith.constant 0 : index
    %6 = vector.load %arg5[%c0_7, %c0_8, %c0_9, %c0_10] : memref<1x1x16x4xf32, #tpu.memory_space<vmem>>, vector<1x1x16x4xf32>
    %7 = vector.shape_cast %6 : vector<1x1x16x4xf32> to vector<1x16x4xf32>
    %8 = arith.truncf %7 : vector<1x16x4xf32> to vector<1x16x4xbf16>
    %9 = tpu.concatenate %2, %5, %8 in 0 : vector<1x16x4xbf16>, vector<8x16x4xbf16>, vector<1x16x4xbf16> -> vector<10x16x4xbf16>
    %10 = vector.extract_strided_slice %9 {offsets = [0, 1, 0], sizes = [10, 1, 4], strides = [1, 1, 1]} : vector<10x16x4xbf16> to vector<10x1x4xbf16>
    %11 = vector.extract_strided_slice %9 {offsets = [0, 14, 0], sizes = [10, 1, 4], strides = [1, 1, 1]} : vector<10x16x4xbf16> to vector<10x1x4xbf16>
    %12 = tpu.concatenate %10, %9, %11 in 1 : vector<10x1x4xbf16>, vector<10x16x4xbf16>, vector<10x1x4xbf16> -> vector<10x18x4xbf16>
    %13 = vector.extract_strided_slice %12 {offsets = [0, 0, 0], sizes = [8, 16, 4], strides = [1, 1, 1]} : vector<10x18x4xbf16> to vector<8x16x4xbf16>
    %14 = vector.extract_strided_slice %12 {offsets = [0, 1, 0], sizes = [8, 16, 4], strides = [1, 1, 1]} : vector<10x18x4xbf16> to vector<8x16x4xbf16>
    %15 = vector.extract_strided_slice %12 {offsets = [0, 2, 0], sizes = [8, 16, 4], strides = [1, 1, 1]} : vector<10x18x4xbf16> to vector<8x16x4xbf16>
    %16 = vector.extract_strided_slice %12 {offsets = [1, 0, 0], sizes = [8, 16, 4], strides = [1, 1, 1]} : vector<10x18x4xbf16> to vector<8x16x4xbf16>
    %17 = vector.extract_strided_slice %12 {offsets = [1, 1, 0], sizes = [8, 16, 4], strides = [1, 1, 1]} : vector<10x18x4xbf16> to vector<8x16x4xbf16>
    %18 = vector.extract_strided_slice %12 {offsets = [1, 2, 0], sizes = [8, 16, 4], strides = [1, 1, 1]} : vector<10x18x4xbf16> to vector<8x16x4xbf16>
    %19 = vector.extract_strided_slice %12 {offsets = [2, 0, 0], sizes = [8, 16, 4], strides = [1, 1, 1]} : vector<10x18x4xbf16> to vector<8x16x4xbf16>
    %20 = vector.extract_strided_slice %12 {offsets = [2, 1, 0], sizes = [8, 16, 4], strides = [1, 1, 1]} : vector<10x18x4xbf16> to vector<8x16x4xbf16>
    %21 = vector.extract_strided_slice %12 {offsets = [2, 2, 0], sizes = [8, 16, 4], strides = [1, 1, 1]} : vector<10x18x4xbf16> to vector<8x16x4xbf16>
    %22 = tpu.concatenate %13, %14, %15, %16, %17, %18, %19, %20, %21 in 2 : vector<8x16x4xbf16>, vector<8x16x4xbf16>, vector<8x16x4xbf16>, vector<8x16x4xbf16>, vector<8x16x4xbf16>, vector<8x16x4xbf16>, vector<8x16x4xbf16>, vector<8x16x4xbf16>, vector<8x16x4xbf16> -> vector<8x16x36xbf16>
    %23 = vector.shape_cast %22 : vector<8x16x36xbf16> to vector<128x36xbf16>
    %c0_11 = arith.constant 0 : index
    %c0_12 = arith.constant 0 : index
    %24 = vector.load %arg6[%c0_11, %c0_12] : memref<36x4xbf16, #tpu.memory_space<vmem>>, vector<36x4xbf16>
    %cst = arith.constant dense<0.000000e+00> : vector<128x4xf32>
    %25 = tpu.matmul %23, %24, %cst {dimension_numbers = #tpu.dot_dimension_numbers<[1], [0], [0], [1], [0, 0, 1, 1], [], []>} : vector<128x36xbf16>, vector<36x4xbf16>, vector<128x4xf32> -> vector<128x4xf32>
    %c0_i32 = arith.constant 0 : i32
    %26 = arith.cmpi eq, %arg1, %c0_i32 : i32
    %c0_i32_13 = arith.constant 0 : i32
    %27 = arith.cmpi eq, %arg2, %c0_i32_13 : i32
    %28 = arith.andi %26, %27 : i1
    %29 = arith.extui %28 : i1 to i32
    %c0_i32_14 = arith.constant 0 : i32
    %30 = arith.cmpi ne, %29, %c0_i32_14 : i32
    scf.if %30 {
      %cst_18 = arith.constant 0.000000e+00 : f32
      %37 = vector.broadcast %cst_18 : f32 to vector<2x4xf32>
      %c0_19 = arith.constant 0 : index
      %c0_20 = arith.constant 0 : index
      %38 = vector.load %arg8[%c0_19, %c0_20] : memref<2x4xf32, #tpu.memory_space<vmem>>, vector<2x4xf32>
      tpu.vector_store %arg8[%c0_19, %c0_20], %37 {strides = array<i32>} : memref<2x4xf32, #tpu.memory_space<vmem>>, vector<2x4xf32>,
    } else {
    }
    %c0_i32_15 = arith.constant 0 : i32
    %31 = arith.cmpi eq, %arg1, %c0_i32_15 : i32
    %32 = arith.extui %31 : i1 to i32
    %c0_i32_16 = arith.constant 0 : i32
    %33 = arith.cmpi ne, %32, %c0_i32_16 : i32
    scf.if %33 {
      %c0_18 = arith.constant 0 : index
      %c0_19 = arith.constant 0 : index
      %37 = vector.load %arg8[%c0_18, %c0_19] : memref<2x4xf32, #tpu.memory_space<vmem>>, vector<1x4xf32>
      %cst_20 = arith.constant dense<0.000000e+00> : vector<4xf32>
      %38 = vector.multi_reduction <add>, %25, %cst_20 [0] : vector<128x4xf32> to vector<4xf32>
      %39 = vector.shape_cast %38 : vector<4xf32> to vector<1x4xf32>
      %40 = arith.addf %37, %39 : vector<1x4xf32>
      %c0_21 = arith.constant 0 : index
      %c0_22 = arith.constant 0 : index
      %41 = vector.load %arg8[%c0_21, %c0_22] : memref<2x4xf32, #tpu.memory_space<vmem>>, vector<1x4xf32>
      tpu.vector_store %arg8[%c0_21, %c0_22], %40 {strides = array<i32>} : memref<2x4xf32, #tpu.memory_space<vmem>>, vector<1x4xf32>,
      %c1 = arith.constant 1 : index
      %c0_23 = arith.constant 0 : index
      %42 = vector.load %arg8[%c1, %c0_23] : memref<2x4xf32, #tpu.memory_space<vmem>>, vector<1x4xf32>
      %43 = arith.mulf %25, %25 : vector<128x4xf32>
      %cst_24 = arith.constant dense<0.000000e+00> : vector<4xf32>
      %44 = vector.multi_reduction <add>, %43, %cst_24 [0] : vector<128x4xf32> to vector<4xf32>
      %45 = vector.shape_cast %44 : vector<4xf32> to vector<1x4xf32>
      %46 = arith.addf %42, %45 : vector<1x4xf32>
      %c1_25 = arith.constant 1 : index
      %c0_26 = arith.constant 0 : index
      %47 = vector.load %arg8[%c1_25, %c0_26] : memref<2x4xf32, #tpu.memory_space<vmem>>, vector<1x4xf32>
      tpu.vector_store %arg8[%c1_25, %c0_26], %46 {strides = array<i32>} : memref<2x4xf32, #tpu.memory_space<vmem>>, vector<1x4xf32>,
    } else {
    }
    %c1_i32 = arith.constant 1 : i32
    %34 = arith.cmpi eq, %arg1, %c1_i32 : i32
    %35 = arith.extui %34 : i1 to i32
    %c0_i32_17 = arith.constant 0 : i32
    %36 = arith.cmpi ne, %35, %c0_i32_17 : i32
    scf.if %36 {
      %c0_18 = arith.constant 0 : index
      %c0_19 = arith.constant 0 : index
      %37 = vector.load %arg8[%c0_18, %c0_19] : memref<2x4xf32, #tpu.memory_space<vmem>>, vector<1x4xf32>
      %cst_20 = arith.constant 3.906250e-03 : f32
      %38 = vector.broadcast %cst_20 : f32 to vector<1x4xf32>
      %39 = arith.mulf %37, %38 : vector<1x4xf32>
      %c1 = arith.constant 1 : index
      %c0_21 = arith.constant 0 : index
      %40 = vector.load %arg8[%c1, %c0_21] : memref<2x4xf32, #tpu.memory_space<vmem>>, vector<1x4xf32>
      %cst_22 = arith.constant 3.906250e-03 : f32
      %41 = vector.broadcast %cst_22 : f32 to vector<1x4xf32>
      %42 = arith.mulf %40, %41 : vector<1x4xf32>
      %43 = arith.mulf %39, %39 : vector<1x4xf32>
      %44 = arith.subf %42, %43 : vector<1x4xf32>
      %cst_23 = arith.constant 9.99999974E-6 : f32
      %45 = vector.broadcast %cst_23 : f32 to vector<1x4xf32>
      %46 = arith.addf %44, %45 : vector<1x4xf32>
      %47 = math.rsqrt %46 : vector<1x4xf32>
      %48 = vector.broadcast %39 : vector<1x4xf32> to vector<128x4xf32>
      %49 = arith.subf %25, %48 : vector<128x4xf32>
      %50 = vector.broadcast %47 : vector<1x4xf32> to vector<128x4xf32>
      %51 = arith.mulf %49, %50 : vector<128x4xf32>
      %c0_24 = arith.constant 0 : index
      %c0_25 = arith.constant 0 : index
      %c0_26 = arith.constant 0 : index
      %c0_27 = arith.constant 0 : index
      %52 = vector.load %arg3[%c0_24, %c0_25, %c0_26, %c0_27] : memref<1x8x16x4xf32, #tpu.memory_space<vmem>>, vector<1x8x16x4xf32>
      %53 = vector.shape_cast %52 : vector<1x8x16x4xf32> to vector<8x16x4xf32>
      %54 = vector.shape_cast %51 : vector<128x4xf32> to vector<8x16x4xf32>
      %55 = arith.addf %53, %54 : vector<8x16x4xf32>
      %c0_28 = arith.constant 0 : index
      %c0_29 = arith.constant 0 : index
      %c0_30 = arith.constant 0 : index
      %c0_31 = arith.constant 0 : index
      %56 = vector.load %arg7[%c0_28, %c0_29, %c0_30, %c0_31] : memref<1x8x16x4xf32, #tpu.memory_space<vmem>>, vector<1x8x16x4xf32>
      %57 = vector.shape_cast %56 : vector<1x8x16x4xf32> to vector<8x16x4xf32>
      %58 = vector.shape_cast %55 : vector<8x16x4xf32> to vector<1x8x16x4xf32>
      tpu.vector_store %arg7[%c0_28, %c0_29, %c0_30, %c0_31], %58 {strides = array<i32>} : memref<1x8x16x4xf32, #tpu.memory_space<vmem>>, vector<1x8x16x4xf32>,
    } else {
    }
    return
  }
  func.func @transform_0(%arg0: i32, %arg1: i32, %arg2: i32) -> (i32, i32, i32, i32) {
    %c0_i32 = arith.constant 0 : i32
    %c0_i32_0 = arith.constant 0 : i32
    %c0_i32_1 = arith.constant 0 : i32
    return %arg0, %arg2, %c0_i32, %c0_i32_0 : i32, i32, i32, i32
  }
  func.func @transform_1(%arg0: i32, %arg1: i32, %arg2: i32) -> (i32, i32, i32, i32) {
    %c0_i32 = arith.constant 0 : i32
    %0 = arith.cmpi eq, %arg2, %c0_i32 : i32
    %c8_i32 = arith.constant 8 : i32
    %1 = arith.muli %arg2, %c8_i32 : i32
    %c1_i32 = arith.constant 1 : i32
    %2 = arith.subi %1, %c1_i32 : i32
    %c1_i32_0 = arith.constant 1 : i32
    %3 = arith.select %0, %c1_i32_0, %2 : i32
    %c0_i32_1 = arith.constant 0 : i32
    %c0_i32_2 = arith.constant 0 : i32
    %c0_i32_3 = arith.constant 0 : i32
    return %arg0, %3, %c0_i32_1, %c0_i32_2 : i32, i32, i32, i32
  }
  func.func @transform_2(%arg0: i32, %arg1: i32, %arg2: i32) -> (i32, i32, i32, i32) {
    %c1_i32 = arith.constant 1 : i32
    %0 = arith.cmpi eq, %arg2, %c1_i32 : i32
    %c1_i32_0 = arith.constant 1 : i32
    %1 = arith.addi %arg2, %c1_i32_0 : i32
    %c8_i32 = arith.constant 8 : i32
    %2 = arith.muli %1, %c8_i32 : i32
    %c14_i32 = arith.constant 14 : i32
    %3 = arith.select %0, %c14_i32, %2 : i32
    %c0_i32 = arith.constant 0 : i32
    %c0_i32_1 = arith.constant 0 : i32
    %c0_i32_2 = arith.constant 0 : i32
    return %arg0, %3, %c0_i32, %c0_i32_1 : i32, i32, i32, i32
  }
  func.func @transform_3(%arg0: i32, %arg1: i32, %arg2: i32) -> (i32, i32) {
    %c0_i32 = arith.constant 0 : i32
    %c0_i32_0 = arith.constant 0 : i32
    %c0_i32_1 = arith.constant 0 : i32
    return %c0_i32, %c0_i32_0 : i32, i32
  }
  func.func @transform_4(%arg0: i32, %arg1: i32, %arg2: i32) -> (i32, i32, i32, i32) {
    %0 = arith.muli %arg2, %arg1 : i32
    %c0_i32 = arith.constant 0 : i32
    %c0_i32_0 = arith.constant 0 : i32
    %c0_i32_1 = arith.constant 0 : i32
    return %arg0, %0, %c0_i32, %c0_i32_0 : i32, i32, i32, i32
  }
}

</mosaic_0001>

<llo_original>
// kernel: resnet_block_forward.1
$region0: #{resnet_block_forward.1}
  #allocation0 [shape = 'u32[]', space=smem, size = 0x4, offset = 0x4, fixed_abs, tag = 'smem constant byte address 0x4 - core index']
  #allocation1 [shape = 'u32[144,128]{1,0:T(1,128)}', space=vmem, size = 0x12000, scoped, tag = 'internal scratch']
  #allocation2 [shape = 'f32[2,4]{1,0:T(2,128)}', space=vmem, size = 0x400, scoped, tag = 'scratch operand']
  %s0 = inlined_call_operand.vmem [shape: f32[2,16,16,4], index: 0, kind: input, shape index: {}, may-alias: {0,1,2}]
  %s1 = inlined_call_operand.vmem [shape: f32[2,16,16,4], index: 1, kind: input, shape index: {}, may-alias: {0,1,2}]
  %s2 = inlined_call_operand.vmem [shape: f32[2,16,16,4], index: 2, kind: input, shape index: {}, may-alias: {0,1,2}]
  %s3 = inlined_call_operand.vmem [shape: bf16[36,4], index: 3, kind: input, shape index: {}]
  %s4 = inlined_call_operand.vmem [shape: f32[2,16,16,4], index: 4, kind: output, shape index: {}]
  %s5 = sld [smem:[#allocation0]]
  $region61: #{resnet_block_forward.1} parent=0
    _
  %s7 = ssub.s32 1, %s5
  %s8 = scalar_select 0, %s7, %s5
  loop: start=0, step=1, limit=10
  $region2: #{resnet_block_forward.1} parent=0 // loop_pre_header
    _
  $region3: #{resnet_block_forward.1} parent=0 // loop_header
    %s10 = sphi 0, %s14
    %p11 = scmp.ge.s32.totalorder %s10, 10
    %s17 = sphi 0, %s36
    %s18 = sphi 0, %s32
    %s19 = sphi 0, %s28
    %s20 = sphi 0, %s17
    %s21 = sphi 0, %s18
    %s22 = sphi 0, %s19
    %s23 = sphi 0, %s20
    %s24 = sphi 0, %s21
    %s25 = sphi 0, %s22
    %s41 = sphi 0, %s43
    %s44 = sphi 0, %s41
    %s45 = sphi 0, %s44
    %s61 = sphi 0, %s45
    %s77 = sphi 0, %s79
    %s80 = sphi 0, %s77
    %s81 = sphi 0, %s80
    %s97 = sphi 0, %s81
    %s113 = sphi 0, %s115
    %s116 = sphi 0, %s113
    %s117 = sphi 0, %s116
    %s133 = sphi 0, %s117
    %s137 = sphi 0, %s137
    %s139 = sphi 0, %s137
    %s140 = sphi 0, %s139
    %s154 = sphi 0, %s140
    %s164 = sphi 0, %s166
    %s167 = sphi 0, %s164
    %s168 = sphi 0, %s167
    %s184 = sphi 0, %s168
  $region4: #{resnet_block_forward.1} parent=0 // loop_header_branch
    %13 = sbr.rel (%p11) target = $region8
  $region5: #{resnet_block_forward.1} parent=0 // loop_body
    %s15 = ssub.s32 %s10, 1
    %s16 = ssub.s32 %s10, 2
    %s26 = sadd.s32 1, %s19
    %p27 = scmp.ge.s32.totalorder %s26, 2
    %s28 = scalar_select %p27, 0, %s26
    %s29 = sadd.s32 1, %s18
    %s30 = scalar_select %p27, %s29, %s18
    %p31 = scmp.ge.s32.totalorder %s30, 2
    %s32 = scalar_select %p31, 0, %s30
    %s33 = sadd.s32 1, %s17
    %s34 = scalar_select %p31, %s33, %s17
    %p35 = scmp.ge.s32.totalorder %s34, 2
    %s36 = scalar_select %p35, 0, %s34
    %s37 = ssub.s32 %s17, %s36
    %s38 = ssub.s32 %s19, %s28
    %s39 = sor.u32 %s37, %s38
    %p40 = scmp.eq.s32.totalorder %s39, 0
    %s42 = sadd.s32 %s41, 1
    %s43 = scalar_select %p40, %s41, %s42
    %p46 = pneg %p40
    %p47 = scmp.eq.s32.totalorder %s10, 7
    %p48 = por %p46, %p47
    %p49 = scmp.ne.s32.totalorder %s41, %s44
    %p50 = scmp.eq.s32.totalorder %s10, 0
    %p51 = por %p49, %p50
    %p52 = scmp.ne.s32.totalorder %s41, %s44
    %p53 = scmp.eq.s32.totalorder %s15, 7
    %p54 = por %p52, %p53
    %p55 = scmp.ne.s32.totalorder %s44, %s45
    %p56 = scmp.eq.s32.totalorder %s15, 0
    %p57 = por %p55, %p56
    %p58 = scmp.ne.s32.totalorder %s44, %s45
    %p59 = scmp.eq.s32.totalorder %s16, 7
    %p60 = por %p58, %p59
    %p62 = scmp.ne.s32.totalorder %s45, %s61
    %p63 = scmp.eq.s32.totalorder %s16, 0
    %p64 = por %p62, %p63
    %p65 = scmp.eq.s32.totalorder %s19, 0
    %s66 = smul.u32 %s19, 8
    %s67 = ssub.s32 %s66, 1
    %s68 = scalar_select %p65, 1, %s67
    %p69 = scmp.eq.s32.totalorder %s28, 0
    %s70 = smul.u32 %s28, 8
    %s71 = ssub.s32 %s70, 1
    %s72 = scalar_select %p69, 1, %s71
    %s73 = ssub.s32 %s17, %s36
    %s74 = ssub.s32 %s68, %s72
    %s75 = sor.u32 %s73, %s74
    %p76 = scmp.eq.s32.totalorder %s75, 0
    %s78 = sadd.s32 %s77, 1
    %s79 = scalar_select %p76, %s77, %s78
    %p82 = pneg %p76
    %p83 = scmp.eq.s32.totalorder %s10, 7
    %p84 = por %p82, %p83
    %p85 = scmp.ne.s32.totalorder %s77, %s80
    %p86 = scmp.eq.s32.totalorder %s10, 0
    %p87 = por %p85, %p86
    %p88 = scmp.ne.s32.totalorder %s77, %s80
    %p89 = scmp.eq.s32.totalorder %s15, 7
    %p90 = por %p88, %p89
    %p91 = scmp.ne.s32.totalorder %s80, %s81
    %p92 = scmp.eq.s32.totalorder %s15, 0
    %p93 = por %p91, %p92
    %p94 = scmp.ne.s32.totalorder %s80, %s81
    %p95 = scmp.eq.s32.totalorder %s16, 7
    %p96 = por %p94, %p95
    %p98 = scmp.ne.s32.totalorder %s81, %s97
    %p99 = scmp.eq.s32.totalorder %s16, 0
    %p100 = por %p98, %p99
    %p101 = scmp.eq.s32.totalorder %s19, 1
    %s102 = sadd.s32 %s19, 1
    %s103 = smul.u32 %s102, 8
    %s104 = scalar_select %p101, 14, %s103
    %p105 = scmp.eq.s32.totalorder %s28, 1
    %s106 = sadd.s32 %s28, 1
    %s107 = smul.u32 %s106, 8
    %s108 = scalar_select %p105, 14, %s107
    %s109 = ssub.s32 %s17, %s36
    %s110 = ssub.s32 %s104, %s108
    %s111 = sor.u32 %s109, %s110
    %p112 = scmp.eq.s32.totalorder %s111, 0
    %s114 = sadd.s32 %s113, 1
    %s115 = scalar_select %p112, %s113, %s114
    %p118 = pneg %p112
    %p119 = scmp.eq.s32.totalorder %s10, 7
    %p120 = por %p118, %p119
    %p121 = scmp.ne.s32.totalorder %s113, %s116
    %p122 = scmp.eq.s32.totalorder %s10, 0
    %p123 = por %p121, %p122
    %p124 = scmp.ne.s32.totalorder %s113, %s116
    %p125 = scmp.eq.s32.totalorder %s15, 7
    %p126 = por %p124, %p125
    %p127 = scmp.ne.s32.totalorder %s116, %s117
    %p128 = scmp.eq.s32.totalorder %s15, 0
    %p129 = por %p127, %p128
    %p130 = scmp.ne.s32.totalorder %s116, %s117
    %p131 = scmp.eq.s32.totalorder %s16, 7
    %p132 = por %p130, %p131
    %p134 = scmp.ne.s32.totalorder %s117, %s133
    %p135 = scmp.eq.s32.totalorder %s16, 0
    %p136 = por %p134, %p135
    %s138 = sadd.s32 %s137, 1
    %p141 = scmp.eq.s32.totalorder %s10, 7
    %p142 = scmp.ne.s32.totalorder %s137, %s139
    %p143 = scmp.eq.s32.totalorder %s10, 0
    %p144 = por %p142, %p143
    %p145 = scmp.ne.s32.totalorder %s137, %s139
    %p146 = scmp.eq.s32.totalorder %s15, 7
    %p147 = por %p145, %p146
    %p148 = scmp.ne.s32.totalorder %s139, %s140
    %p149 = scmp.eq.s32.totalorder %s15, 0
    %p150 = por %p148, %p149
    %p151 = scmp.ne.s32.totalorder %s139, %s140
    %p152 = scmp.eq.s32.totalorder %s16, 7
    %p153 = por %p151, %p152
    %p155 = scmp.ne.s32.totalorder %s140, %s154
    %p156 = scmp.eq.s32.totalorder %s16, 0
    %p157 = por %p155, %p156
    %s158 = smul.u32 %s19, %s18
    %s159 = smul.u32 %s28, %s32
    %s160 = ssub.s32 %s17, %s36
    %s161 = ssub.s32 %s158, %s159
    %s162 = sor.u32 %s160, %s161
    %p163 = scmp.eq.s32.totalorder %s162, 0
    %s165 = sadd.s32 %s164, 1
    %s166 = scalar_select %p163, %s164, %s165
    %p169 = pneg %p163
    %p170 = scmp.eq.s32.totalorder %s10, 7
    %p171 = por %p169, %p170
    %p172 = scmp.ne.s32.totalorder %s164, %s167
    %p173 = scmp.eq.s32.totalorder %s10, 0
    %p174 = por %p172, %p173
    %p175 = scmp.ne.s32.totalorder %s164, %s167
    %p176 = scmp.eq.s32.totalorder %s15, 7
    %p177 = por %p175, %p176
    %p178 = scmp.ne.s32.totalorder %s167, %s168
    %p179 = scmp.eq.s32.totalorder %s15, 0
    %p180 = por %p178, %p179
    %p181 = scmp.ne.s32.totalorder %s167, %s168
    %p182 = scmp.eq.s32.totalorder %s16, 7
    %p183 = por %p181, %p182
    %p185 = scmp.ne.s32.totalorder %s168, %s184
    %p186 = scmp.eq.s32.totalorder %s16, 0
    %p187 = por %p185, %p186
    %p188 = scmp.le.s32.totalorder 1, %s10
    %p189 = scmp.lt.s32.totalorder %s10, 9
    %p190 = pnand %p188, %p189
    %p191 = pneg %p190
    // Predicated region
    $region9: #{resnet_block_forward.1} parent=5 // pred_check
      _
    $region10: #{resnet_block_forward.1} parent=5 // pred_check_branch
      %193 = sbr.rel (%p190) target = $region12
    $region11: #{resnet_block_forward.1} parent=5 // pred_region
      %s194 = ssub.s32 %s10, 1
      // Predicated region
      $region13: #{resnet_block_forward.1} parent=11 // pred_check
        %p195 = pneg %p150
      $region14: #{resnet_block_forward.1} parent=11 // pred_check_branch
        %197 = sbr.rel (%p195) target = $region16
      $region15: #{resnet_block_forward.1} parent=11 // pred_region
        _
      $region16: #{resnet_block_forward.1} parent=11 // pred_fallthru
        _
    $region12: #{resnet_block_forward.1} parent=5 // pred_fallthru
      _
    %p198 = scmp.lt.s32.totalorder %s10, 8
    // Predicated region
    $region17: #{resnet_block_forward.1} parent=5 // pred_check
      %p199 = pneg %p198
    $region18: #{resnet_block_forward.1} parent=5 // pred_check_branch
      %201 = sbr.rel (%p199) target = $region20
    $region19: #{resnet_block_forward.1} parent=5 // pred_region
      // Predicated region
      $region21: #{resnet_block_forward.1} parent=19 // pred_check
        %p202 = pneg %p51
      $region22: #{resnet_block_forward.1} parent=19 // pred_check_branch
        %204 = sbr.rel (%p202) target = $region24
      $region23: #{resnet_block_forward.1} parent=19 // pred_region
        %s205 = smul.u32 8, %s19
        %p206 = scmp.lt.s32.totalorder %s17, 1
        %s207 = scalar_select %p206, %s17, 1
        %p208 = scmp.lt.s32.totalorder %s205, 15
        %s209 = scalar_select %p208, %s205, 15
        %s210 = smul.addr %s209, 2
        %s211 = smul.addr %s207, 32
        %s212 = sadd.s32 %s210, %s211
        %s213 = smul.addr %s212, 8
        %s214 = scalar_lea.vmem %s0, %s213
        %s215 = smul.u32 8, %s19
      $region24: #{resnet_block_forward.1} parent=19 // pred_fallthru
        _
      // Predicated region
      $region25: #{resnet_block_forward.1} parent=19 // pred_check
        %p216 = pneg %p87
      $region26: #{resnet_block_forward.1} parent=19 // pred_check_branch
        %218 = sbr.rel (%p216) target = $region28
      $region27: #{resnet_block_forward.1} parent=19 // pred_region
        %p219 = scmp.eq.s32.totalorder %s19, 0
        %s220 = smul.u32 %s19, 8
        %s221 = ssub.s32 %s220, 1
        %s222 = scalar_select %p219, 1, %s221
        %p223 = scmp.lt.s32.totalorder %s17, 1
        %s224 = scalar_select %p223, %s17, 1
        %p225 = scmp.lt.s32.totalorder %s222, 15
        %s226 = scalar_select %p225, %s222, 15
        %s227 = smul.addr %s226, 2
        %s228 = smul.addr %s224, 32
        %s229 = sadd.s32 %s227, %s228
        %s230 = smul.addr %s229, 8
        %s231 = scalar_lea.vmem %s1, %s230
        %p232 = scmp.eq.s32.totalorder %s19, 0
        %s233 = smul.u32 %s19, 8
        %s234 = ssub.s32 %s233, 1
        %s235 = scalar_select %p232, 1, %s234
      $region28: #{resnet_block_forward.1} parent=19 // pred_fallthru
        _
      // Predicated region
      $region29: #{resnet_block_forward.1} parent=19 // pred_check
        %p236 = pneg %p123
      $region30: #{resnet_block_forward.1} parent=19 // pred_check_branch
        %238 = sbr.rel (%p236) target = $region32
      $region31: #{resnet_block_forward.1} parent=19 // pred_region
        %p239 = scmp.eq.s32.totalorder %s19, 1
        %s240 = sadd.s32 %s19, 1
        %s241 = smul.u32 %s240, 8
        %s242 = scalar_select %p239, 14, %s241
        %p243 = scmp.lt.s32.totalorder %s17, 1
        %s244 = scalar_select %p243, %s17, 1
        %p245 = scmp.lt.s32.totalorder %s242, 15
        %s246 = scalar_select %p245, %s242, 15
        %s247 = smul.addr %s246, 2
        %s248 = smul.addr %s244, 32
        %s249 = sadd.s32 %s247, %s248
        %s250 = smul.addr %s249, 8
        %s251 = scalar_lea.vmem %s2, %s250
        %p252 = scmp.eq.s32.totalorder %s19, 1
        %s253 = sadd.s32 %s19, 1
        %s254 = smul.u32 %s253, 8
        %s255 = scalar_select %p252, 14, %s254
      $region32: #{resnet_block_forward.1} parent=19 // pred_fallthru
        _
    $region20: #{resnet_block_forward.1} parent=5 // pred_fallthru
      _
    %p256 = scmp.le.s32.totalorder 1, %s10
    %p257 = scmp.lt.s32.totalorder %s10, 9
    %p258 = pnand %p256, %p257
    %p259 = pneg %p258
    // Predicated region
    $region33: #{resnet_block_forward.1} parent=5 // pred_check
      _
    $region34: #{resnet_block_forward.1} parent=5 // pred_check_branch
      %261 = sbr.rel (%p258) target = $region36
    $region35: #{resnet_block_forward.1} parent=5 // pred_region
      %s262 = ssub.s32 %s10, 1
      %s263 = smul.u32 8, %s22
      %p264 = scmp.lt.s32.totalorder %s20, 1
      %s265 = scalar_select %p264, %s20, 1
      %p266 = scmp.lt.s32.totalorder %s263, 15
      %s267 = scalar_select %p266, %s263, 15
      %s268 = smul.addr %s267, 2
      %s269 = smul.addr %s265, 32
      %s270 = sadd.s32 %s268, %s269
      %s271 = smul.addr %s270, 8
      %s272 = scalar_lea.vmem %s0, %s271
      %p273 = pneg %p57
      %p274 = pneg %p54
      %p275 = scmp.eq.s32.totalorder %s22, 0
      %s276 = smul.u32 %s22, 8
      %s277 = ssub.s32 %s276, 1
      %s278 = scalar_select %p275, 1, %s277
      %p279 = scmp.lt.s32.totalorder %s20, 1
      %s280 = scalar_select %p279, %s20, 1
      %p281 = scmp.lt.s32.totalorder %s278, 15
      %s282 = scalar_select %p281, %s278, 15
      %s283 = smul.addr %s282, 2
      %s284 = smul.addr %s280, 32
      %s285 = sadd.s32 %s283, %s284
      %s286 = smul.addr %s285, 8
      %s287 = scalar_lea.vmem %s1, %s286
      %p288 = pneg %p93
      %p289 = pneg %p90
      %p290 = scmp.eq.s32.totalorder %s22, 1
      %s291 = sadd.s32 %s22, 1
      %s292 = smul.u32 %s291, 8
      %s293 = scalar_select %p290, 14, %s292
      %p294 = scmp.lt.s32.totalorder %s20, 1
      %s295 = scalar_select %p294, %s20, 1
      %p296 = scmp.lt.s32.totalorder %s293, 15
      %s297 = scalar_select %p296, %s293, 15
      %s298 = smul.addr %s297, 2
      %s299 = smul.addr %s295, 32
      %s300 = sadd.s32 %s298, %s299
      %s301 = smul.addr %s300, 8
      %s302 = scalar_lea.vmem %s2, %s301
      %p303 = pneg %p129
      %p304 = pneg %p126
      %p305 = pneg %p150
      %p306 = pneg %p147
      %p307 = pneg %p180
      %p308 = pneg %p177
      %s309 = smul.u32 %s22, %s21
      %s310 = smul.u32 8, %s309
      %p311 = scmp.lt.s32.totalorder %s20, 1
      %s312 = scalar_select %p311, %s20, 1
      %p313 = scmp.lt.s32.totalorder %s310, 15
      %s314 = scalar_select %p313, %s310, 15
      %s315 = smul.addr %s314, 2
      %s316 = smul.addr %s312, 32
      %s317 = sadd.s32 %s315, %s316
      %s318 = smul.addr %s317, 8
      %s319 = scalar_lea.vmem %s4, %s318
      %s320 = smul.u32 8, %s22
      %p321 = scmp.lt.s32.totalorder %s20, 1
      %s322 = scalar_select %p321, %s20, 1
      %p323 = scmp.lt.s32.totalorder %s320, 15
      %s324 = scalar_select %p323, %s320, 15
      %s325 = smul.addr %s324, 2
      %s326 = smul.addr %s322, 32
      %s327 = sadd.s32 %s325, %s326
      %s328 = smul.addr %s327, 8
      %s329 = scalar_lea.vmem %s0, %s328
      %s330 = smul.u32 8, %s22
      %p331 = scmp.eq.s32.totalorder %s22, 0
      %s332 = smul.u32 %s22, 8
      %s333 = ssub.s32 %s332, 1
      %s334 = scalar_select %p331, 1, %s333
      %p335 = scmp.lt.s32.totalorder %s20, 1
      %s336 = scalar_select %p335, %s20, 1
      %p337 = scmp.lt.s32.totalorder %s334, 15
      %s338 = scalar_select %p337, %s334, 15
      %s339 = smul.addr %s338, 2
      %s340 = smul.addr %s336, 32
      %s341 = sadd.s32 %s339, %s340
      %s342 = smul.addr %s341, 8
      %s343 = scalar_lea.vmem %s1, %s342
      %p344 = scmp.eq.s32.totalorder %s22, 0
      %s345 = smul.u32 %s22, 8
      %s346 = ssub.s32 %s345, 1
      %s347 = scalar_select %p344, 1, %s346
      %p348 = scmp.eq.s32.totalorder %s22, 1
      %s349 = sadd.s32 %s22, 1
      %s350 = smul.u32 %s349, 8
      %s351 = scalar_select %p348, 14, %s350
      %p352 = scmp.lt.s32.totalorder %s20, 1
      %s353 = scalar_select %p352, %s20, 1
      %p354 = scmp.lt.s32.totalorder %s351, 15
      %s355 = scalar_select %p354, %s351, 15
      %s356 = smul.addr %s355, 2
      %s357 = smul.addr %s353, 32
      %s358 = sadd.s32 %s356, %s357
      %s359 = smul.addr %s358, 8
      %s360 = scalar_lea.vmem %s2, %s359
      %p361 = scmp.eq.s32.totalorder %s22, 1
      %s362 = sadd.s32 %s22, 1
      %s363 = smul.u32 %s362, 8
      %s364 = scalar_select %p361, 14, %s363
      %s365 = smul.u32 %s22, %s21
      %s366 = smul.u32 8, %s365
      %p367 = scmp.lt.s32.totalorder %s20, 1
      %s368 = scalar_select %p367, %s20, 1
      %p369 = scmp.lt.s32.totalorder %s366, 15
      %s370 = scalar_select %p369, %s366, 15
      %s371 = smul.addr %s370, 2
      %s372 = smul.addr %s368, 32
      %s373 = sadd.s32 %s371, %s372
      %s374 = smul.addr %s373, 8
      %s375 = scalar_lea.vmem %s4, %s374
      %s376 = smul.u32 %s22, %s21
      %s377 = smul.u32 8, %s376
      %v379 = vld [vmem:[%s343] sm:$0xff]
      %v380 = vld [vmem:[%s343 + $0x8] sm:$0xff]
      %v381 = vpack.c.bf16 %v380, %v379
      %v382 = vld [vmem:[%s329] sm:$0xff]
      %v383 = vld [vmem:[%s329 + $0x8] sm:$0xff]
      %v384 = vld [vmem:[%s329 + $0x10] sm:$0xff]
      %v385 = vld [vmem:[%s329 + $0x18] sm:$0xff]
      %v386 = vld [vmem:[%s329 + $0x20] sm:$0xff]
      %v387 = vld [vmem:[%s329 + $0x28] sm:$0xff]
      %v388 = vld [vmem:[%s329 + $0x30] sm:$0xff]
      %v389 = vld [vmem:[%s329 + $0x38] sm:$0xff]
      %v390 = vld [vmem:[%s329 + $0x40] sm:$0xff]
      %v391 = vld [vmem:[%s329 + $0x48] sm:$0xff]
      %v392 = vld [vmem:[%s329 + $0x50] sm:$0xff]
      %v393 = vld [vmem:[%s329 + $0x58] sm:$0xff]
      %v394 = vld [vmem:[%s329 + $0x60] sm:$0xff]
      %v395 = vld [vmem:[%s329 + $0x68] sm:$0xff]
      %v396 = vld [vmem:[%s329 + $0x70] sm:$0xff]
      %v397 = vld [vmem:[%s329 + $0x78] sm:$0xff]
      %v398 = vpack.c.bf16 %v383, %v382
      %v399 = vpack.c.bf16 %v385, %v384
      %v400 = vpack.c.bf16 %v387, %v386
      %v401 = vpack.c.bf16 %v389, %v388
      %v402 = vpack.c.bf16 %v391, %v390
      %v403 = vpack.c.bf16 %v393, %v392
      %v404 = vpack.c.bf16 %v395, %v394
      %v405 = vpack.c.bf16 %v397, %v396
      %v406 = vld [vmem:[%s360] sm:$0xff]
      %v407 = vld [vmem:[%s360 + $0x8] sm:$0xff]
      %v408 = vpack.c.bf16 %v407, %v406
      %v410 = vshrl.u32 %v381, 16
      %v413 = vshrl.u32 %v398, 16
      %v416 = vshrl.u32 %v399, 16
      %v419 = vshrl.u32 %v400, 16
      %v422 = vshrl.u32 %v401, 16
      %v425 = vshrl.u32 %v402, 16
      %v428 = vshrl.u32 %v403, 16
      %v431 = vshrl.u32 %v404, 16
      %v434 = vshrl.u32 %v405, 16
      %v437 = vshrl.u32 %v408, 16
      %v449 = vrot.slane %v410, 7
      %v450 = vshll.u32 %v381, 16
      %v452 = vor.u32 %v449, %v450
      %v453 = vrot.slane %v413, 7
      %v454 = vshll.u32 %v398, 16
      %v456 = vor.u32 %v453, %v454
      %v457 = vrot.slane %v416, 7
      %v458 = vshll.u32 %v399, 16
      %v460 = vor.u32 %v457, %v458
      %v461 = vrot.slane %v419, 7
      %v462 = vshll.u32 %v400, 16
      %v464 = vor.u32 %v461, %v462
      %v465 = vrot.slane %v422, 7
      %v466 = vshll.u32 %v401, 16
      %v468 = vor.u32 %v465, %v466
      %v469 = vrot.slane %v425, 7
      %v470 = vshll.u32 %v402, 16
      %v472 = vor.u32 %v469, %v470
      %v473 = vrot.slane %v428, 7
      %v474 = vshll.u32 %v403, 16
      %v476 = vor.u32 %v473, %v474
      %v477 = vrot.slane %v431, 7
      %v478 = vshll.u32 %v404, 16
      %v480 = vor.u32 %v477, %v478
      %v481 = vrot.slane %v434, 7
      %v482 = vshll.u32 %v405, 16
      %v484 = vor.u32 %v481, %v482
      %v485 = vrot.slane %v437, 7
      %v486 = vshll.u32 %v408, 16
      %v488 = vor.u32 %v485, %v486
      %v509 = vrot.slane %v450, 7
      %v510 = vrot.slane %v454, 7
      %v511 = vrot.slane %v458, 7
      %v512 = vrot.slane %v462, 7
      %v513 = vrot.slane %v466, 7
      %v514 = vrot.slane %v470, 7
      %v515 = vrot.slane %v474, 7
      %v516 = vrot.slane %v478, 7
      %v517 = vrot.slane %v482, 7
      %v518 = vrot.slane %v486, 7
      %vm529 = vcmask 1040384
      %vm530 = vsmask.f32 256
      %vm531 = vmand %vm529, %vm530
      %v532 = vsel %vm531, %v410, %v452
      %v533 = vsel %vm531, %v413, %v456
      %v534 = vsel %vm531, %v416, %v460
      %v535 = vsel %vm531, %v419, %v464
      %v536 = vsel %vm531, %v422, %v468
      %v537 = vsel %vm531, %v425, %v472
      %v538 = vsel %vm531, %v428, %v476
      %v539 = vsel %vm531, %v431, %v480
      %v540 = vsel %vm531, %v434, %v484
      %v541 = vsel %vm531, %v437, %v488
      %v542 = vsel %vm531, %v449, %v509
      %v543 = vsel %vm531, %v453, %v510
      %v544 = vsel %vm531, %v457, %v511
      %v545 = vsel %vm531, %v461, %v512
      %v546 = vsel %vm531, %v465, %v513
      %v547 = vsel %vm531, %v469, %v514
      %v548 = vsel %vm531, %v473, %v515
      %v549 = vsel %vm531, %v477, %v516
      %v550 = vsel %vm531, %v481, %v517
      %v551 = vsel %vm531, %v485, %v518
      %vm552 = vsmask.f32 7424
      %v554 = vshrl.u32 %v532, 16
      %v556 = vshll.u32 %v532, 16
      %v558 = vrot.slane %v556, 1
      %v559 = vor.u32 %v554, %v558
      %v561 = vshll.u32 %v542, 16
      %v563 = vrot.slane %v561, 1
      %v564 = vsel %vm552, %v559, %v563
      %v566 = vshrl.u32 %v533, 16
      %v568 = vshll.u32 %v533, 16
      %v570 = vrot.slane %v568, 1
      %v571 = vor.u32 %v566, %v570
      %v573 = vshll.u32 %v543, 16
      %v575 = vrot.slane %v573, 1
      %v576 = vsel %vm552, %v571, %v575
      %v578 = vshrl.u32 %v534, 16
      %v580 = vshll.u32 %v534, 16
      %v582 = vrot.slane %v580, 1
      %v583 = vor.u32 %v578, %v582
      %v585 = vshll.u32 %v544, 16
      %v587 = vrot.slane %v585, 1
      %v588 = vsel %vm552, %v583, %v587
      %v590 = vshrl.u32 %v535, 16
      %v592 = vshll.u32 %v535, 16
      %v594 = vrot.slane %v592, 1
      %v595 = vor.u32 %v590, %v594
      %v597 = vshll.u32 %v545, 16
      %v599 = vrot.slane %v597, 1
      %v600 = vsel %vm552, %v595, %v599
      %v602 = vshrl.u32 %v536, 16
      %v604 = vshll.u32 %v536, 16
      %v606 = vrot.slane %v604, 1
      %v607 = vor.u32 %v602, %v606
      %v609 = vshll.u32 %v546, 16
      %v611 = vrot.slane %v609, 1
      %v612 = vsel %vm552, %v607, %v611
      %v614 = vshrl.u32 %v537, 16
      %v616 = vshll.u32 %v537, 16
      %v618 = vrot.slane %v616, 1
      %v619 = vor.u32 %v614, %v618
      %v621 = vshll.u32 %v547, 16
      %v623 = vrot.slane %v621, 1
      %v624 = vsel %vm552, %v619, %v623
      %v626 = vshrl.u32 %v538, 16
      %v628 = vshll.u32 %v538, 16
      %v630 = vrot.slane %v628, 1
      %v631 = vor.u32 %v626, %v630
      %v633 = vshll.u32 %v548, 16
      %v635 = vrot.slane %v633, 1
      %v636 = vsel %vm552, %v631, %v635
      %v638 = vshrl.u32 %v539, 16
      %v640 = vshll.u32 %v539, 16
      %v642 = vrot.slane %v640, 1
      %v643 = vor.u32 %v638, %v642
      %v645 = vshll.u32 %v549, 16
      %v647 = vrot.slane %v645, 1
      %v648 = vsel %vm552, %v643, %v647
      %649 = vrot.lane.b32.xlu0 %v564, 4
      %v650 = vpop.permute.xlu0 %649
      %651 = vrot.lane.b32.xlu0 %v576, 4
      %v652 = vpop.permute.xlu0 %651
      %653 = vrot.lane.b32.xlu0 %v588, 4
      %v654 = vpop.permute.xlu0 %653
      %655 = vrot.lane.b32.xlu0 %v600, 4
      %v656 = vpop.permute.xlu0 %655
      %657 = vrot.lane.b32.xlu0 %v612, 4
      %v658 = vpop.permute.xlu0 %657
      %659 = vrot.lane.b32.xlu0 %v624, 4
      %v660 = vpop.permute.xlu0 %659
      %661 = vrot.lane.b32.xlu0 %v636, 4
      %v662 = vpop.permute.xlu0 %661
      %663 = vrot.lane.b32.xlu0 %v648, 4
      %v664 = vpop.permute.xlu0 %663
      %vm681 = vcmask 1046528
      %v682 = vrot.slane %v532, 1
      %v683 = vrot.slane %v542, 1
      %v684 = vsel %vm681, %v682, %v683
      %v685 = vrot.slane %v533, 1
      %v686 = vrot.slane %v543, 1
      %v687 = vsel %vm681, %v685, %v686
      %v688 = vrot.slane %v534, 1
      %v689 = vrot.slane %v544, 1
      %v690 = vsel %vm681, %v688, %v689
      %v691 = vrot.slane %v535, 1
      %v692 = vrot.slane %v545, 1
      %v693 = vsel %vm681, %v691, %v692
      %v694 = vrot.slane %v536, 1
      %v695 = vrot.slane %v546, 1
      %v696 = vsel %vm681, %v694, %v695
      %v697 = vrot.slane %v537, 1
      %v698 = vrot.slane %v547, 1
      %v699 = vsel %vm681, %v697, %v698
      %v700 = vrot.slane %v538, 1
      %v701 = vrot.slane %v548, 1
      %v702 = vsel %vm681, %v700, %v701
      %v703 = vrot.slane %v539, 1
      %v704 = vrot.slane %v549, 1
      %v705 = vsel %vm681, %v703, %v704
      %706 = vrot.lane.b32.xlu0 %v684, 8
      %v707 = vpop.permute.xlu0 %706
      %708 = vrot.lane.b32.xlu0 %v687, 8
      %v709 = vpop.permute.xlu0 %708
      %710 = vrot.lane.b32.xlu0 %v690, 8
      %v711 = vpop.permute.xlu0 %710
      %712 = vrot.lane.b32.xlu0 %v693, 8
      %v713 = vpop.permute.xlu0 %712
      %714 = vrot.lane.b32.xlu0 %v696, 8
      %v715 = vpop.permute.xlu0 %714
      %716 = vrot.lane.b32.xlu0 %v699, 8
      %v717 = vpop.permute.xlu0 %716
      %718 = vrot.lane.b32.xlu0 %v702, 8
      %v719 = vpop.permute.xlu0 %718
      %720 = vrot.lane.b32.xlu0 %v705, 8
      %v721 = vpop.permute.xlu0 %720
      %723 = vrot.lane.b32.xlu0 %v533, 12
      %v724 = vpop.permute.xlu0 %723
      %725 = vrot.lane.b32.xlu0 %v534, 12
      %v726 = vpop.permute.xlu0 %725
      %727 = vrot.lane.b32.xlu0 %v535, 12
      %v728 = vpop.permute.xlu0 %727
      %729 = vrot.lane.b32.xlu0 %v536, 12
      %v730 = vpop.permute.xlu0 %729
      %731 = vrot.lane.b32.xlu0 %v537, 12
      %v732 = vpop.permute.xlu0 %731
      %733 = vrot.lane.b32.xlu0 %v538, 12
      %v734 = vpop.permute.xlu0 %733
      %735 = vrot.lane.b32.xlu0 %v539, 12
      %v736 = vpop.permute.xlu0 %735
      %737 = vrot.lane.b32.xlu0 %v540, 12
      %v738 = vpop.permute.xlu0 %737
      %v740 = vshrl.u32 %v540, 16
      %v742 = vshll.u32 %v540, 16
      %v744 = vrot.slane %v742, 1
      %v745 = vor.u32 %v740, %v744
      %v747 = vshll.u32 %v550, 16
      %v749 = vrot.slane %v747, 1
      %v750 = vsel %vm552, %v745, %v749
      %751 = vrot.lane.b32.xlu0 %v576, 16
      %v752 = vpop.permute.xlu0 %751
      %753 = vrot.lane.b32.xlu0 %v588, 16
      %v754 = vpop.permute.xlu0 %753
      %755 = vrot.lane.b32.xlu0 %v600, 16
      %v756 = vpop.permute.xlu0 %755
      %757 = vrot.lane.b32.xlu0 %v612, 16
      %v758 = vpop.permute.xlu0 %757
      %759 = vrot.lane.b32.xlu0 %v624, 16
      %v760 = vpop.permute.xlu0 %759
      %761 = vrot.lane.b32.xlu0 %v636, 16
      %v762 = vpop.permute.xlu0 %761
      %763 = vrot.lane.b32.xlu0 %v648, 16
      %v764 = vpop.permute.xlu0 %763
      %765 = vrot.lane.b32.xlu0 %v750, 16
      %v766 = vpop.permute.xlu0 %765
      %v768 = vrot.slane %v540, 1
      %v769 = vrot.slane %v550, 1
      %v770 = vsel %vm681, %v768, %v769
      %771 = vrot.lane.b32.xlu0 %v687, 20
      %v772 = vpop.permute.xlu0 %771
      %773 = vrot.lane.b32.xlu0 %v690, 20
      %v774 = vpop.permute.xlu0 %773
      %775 = vrot.lane.b32.xlu0 %v693, 20
      %v776 = vpop.permute.xlu0 %775
      %777 = vrot.lane.b32.xlu0 %v696, 20
      %v778 = vpop.permute.xlu0 %777
      %779 = vrot.lane.b32.xlu0 %v699, 20
      %v780 = vpop.permute.xlu0 %779
      %781 = vrot.lane.b32.xlu0 %v702, 20
      %v782 = vpop.permute.xlu0 %781
      %783 = vrot.lane.b32.xlu0 %v705, 20
      %v784 = vpop.permute.xlu0 %783
      %785 = vrot.lane.b32.xlu0 %v770, 20
      %v786 = vpop.permute.xlu0 %785
      %788 = vrot.lane.b32.xlu0 %v534, 24
      %v789 = vpop.permute.xlu0 %788
      %790 = vrot.lane.b32.xlu0 %v535, 24
      %v791 = vpop.permute.xlu0 %790
      %792 = vrot.lane.b32.xlu0 %v536, 24
      %v793 = vpop.permute.xlu0 %792
      %794 = vrot.lane.b32.xlu0 %v537, 24
      %v795 = vpop.permute.xlu0 %794
      %796 = vrot.lane.b32.xlu0 %v538, 24
      %v797 = vpop.permute.xlu0 %796
      %798 = vrot.lane.b32.xlu0 %v539, 24
      %v799 = vpop.permute.xlu0 %798
      %800 = vrot.lane.b32.xlu0 %v540, 24
      %v801 = vpop.permute.xlu0 %800
      %802 = vrot.lane.b32.xlu0 %v541, 24
      %v803 = vpop.permute.xlu0 %802
      %v805 = vshrl.u32 %v541, 16
      %v807 = vshll.u32 %v541, 16
      %v809 = vrot.slane %v807, 1
      %v810 = vor.u32 %v805, %v809
      %v812 = vshll.u32 %v551, 16
      %v814 = vrot.slane %v812, 1
      %v815 = vsel %vm552, %v810, %v814
      %816 = vrot.lane.b32.xlu0 %v588, 28
      %v817 = vpop.permute.xlu0 %816
      %818 = vrot.lane.b32.xlu0 %v600, 28
      %v819 = vpop.permute.xlu0 %818
      %820 = vrot.lane.b32.xlu0 %v612, 28
      %v821 = vpop.permute.xlu0 %820
      %822 = vrot.lane.b32.xlu0 %v624, 28
      %v823 = vpop.permute.xlu0 %822
      %824 = vrot.lane.b32.xlu0 %v636, 28
      %v825 = vpop.permute.xlu0 %824
      %826 = vrot.lane.b32.xlu0 %v648, 28
      %v827 = vpop.permute.xlu0 %826
      %828 = vrot.lane.b32.xlu0 %v750, 28
      %v829 = vpop.permute.xlu0 %828
      %830 = vrot.lane.b32.xlu0 %v815, 28
      %v831 = vpop.permute.xlu0 %830
      %v833 = vrot.slane %v541, 1
      %v834 = vrot.slane %v551, 1
      %v835 = vsel %vm681, %v833, %v834
      %836 = vrot.lane.b32.xlu0 %v690, 32
      %v837 = vpop.permute.xlu0 %836
      %838 = vrot.lane.b32.xlu0 %v693, 32
      %v839 = vpop.permute.xlu0 %838
      %840 = vrot.lane.b32.xlu0 %v696, 32
      %v841 = vpop.permute.xlu0 %840
      %842 = vrot.lane.b32.xlu0 %v699, 32
      %v843 = vpop.permute.xlu0 %842
      %844 = vrot.lane.b32.xlu0 %v702, 32
      %v845 = vpop.permute.xlu0 %844
      %846 = vrot.lane.b32.xlu0 %v705, 32
      %v847 = vpop.permute.xlu0 %846
      %848 = vrot.lane.b32.xlu0 %v770, 32
      %v849 = vpop.permute.xlu0 %848
      %850 = vrot.lane.b32.xlu0 %v835, 32
      %v851 = vpop.permute.xlu0 %850
      %vm852 = vcmask 31744
      %v854 = vsel %vm852, %v532, %v650
      %v856 = vsel %vm852, %v533, %v652
      %v858 = vsel %vm852, %v534, %v654
      %v860 = vsel %vm852, %v535, %v656
      %v862 = vsel %vm852, %v536, %v658
      %v864 = vsel %vm852, %v537, %v660
      %v866 = vsel %vm852, %v538, %v662
      %v868 = vsel %vm852, %v539, %v664
      %vm869 = vcmask 64512
      %v871 = vsel %vm869, %v854, %v707
      %v873 = vsel %vm869, %v856, %v709
      %v875 = vsel %vm869, %v858, %v711
      %v877 = vsel %vm869, %v860, %v713
      %v879 = vsel %vm869, %v862, %v715
      %v881 = vsel %vm869, %v864, %v717
      %v883 = vsel %vm869, %v866, %v719
      %v885 = vsel %vm869, %v868, %v721
      %vm886 = vcmask 97280
      %v888 = vsel %vm886, %v871, %v724
      %v890 = vsel %vm886, %v873, %v726
      %v892 = vsel %vm886, %v875, %v728
      %v894 = vsel %vm886, %v877, %v730
      %v896 = vsel %vm886, %v879, %v732
      %v898 = vsel %vm886, %v881, %v734
      %v900 = vsel %vm886, %v883, %v736
      %v902 = vsel %vm886, %v885, %v738
      %vm903 = vcmask 130048
      %v905 = vsel %vm903, %v888, %v752
      %v907 = vsel %vm903, %v890, %v754
      %v909 = vsel %vm903, %v892, %v756
      %v911 = vsel %vm903, %v894, %v758
      %v913 = vsel %vm903, %v896, %v760
      %v915 = vsel %vm903, %v898, %v762
      %v917 = vsel %vm903, %v900, %v764
      %v919 = vsel %vm903, %v902, %v766
      %vm920 = vcmask 162816
      %v922 = vsel %vm920, %v905, %v772
      %v924 = vsel %vm920, %v907, %v774
      %v926 = vsel %vm920, %v909, %v776
      %v928 = vsel %vm920, %v911, %v778
      %v930 = vsel %vm920, %v913, %v780
      %v932 = vsel %vm920, %v915, %v782
      %v934 = vsel %vm920, %v917, %v784
      %v936 = vsel %vm920, %v919, %v786
      %vm937 = vcmask 195584
      %v939 = vsel %vm937, %v922, %v789
      %v941 = vsel %vm937, %v924, %v791
      %v943 = vsel %vm937, %v926, %v793
      %v945 = vsel %vm937, %v928, %v795
      %v947 = vsel %vm937, %v930, %v797
      %v949 = vsel %vm937, %v932, %v799
      %v951 = vsel %vm937, %v934, %v801
      %v953 = vsel %vm937, %v936, %v803
      %vm954 = vcmask 228352
      %v956 = vsel %vm954, %v939, %v817
      %v958 = vsel %vm954, %v941, %v819
      %v960 = vsel %vm954, %v943, %v821
      %v962 = vsel %vm954, %v945, %v823
      %v964 = vsel %vm954, %v947, %v825
      %v966 = vsel %vm954, %v949, %v827
      %v968 = vsel %vm954, %v951, %v829
      %v970 = vsel %vm954, %v953, %v831
      %vm971 = vcmask 261120
      %v973 = vsel %vm971, %v956, %v837
      %v975 = vsel %vm971, %v958, %v839
      %v977 = vsel %vm971, %v960, %v841
      %v979 = vsel %vm971, %v962, %v843
      %v981 = vsel %vm971, %v964, %v845
      %v983 = vsel %vm971, %v966, %v847
      %v985 = vsel %vm971, %v968, %v849
      %v987 = vsel %vm971, %v970, %v851
      %v988 = vld [vmem:[%s3] sm:$0xf]
      %v989 = vld [vmem:[%s3 + $0x4] sm:$0xf]
      %v990 = vld [vmem:[%s3 + $0x8] sm:$0xf]
      %v991 = vld [vmem:[%s3 + $0xc] sm:$0xf]
      %v992 = vld [vmem:[%s3 + $0x10] sm:$0x3]
      %v998 = vunpack.c.l.b16 %v988
      %v999 = vunpack.c.l.b16 %v989
      %v1000 = vunpack.c.l.b16 %v990
      %v1001 = vunpack.c.l.b16 %v991
      %v1002 = vunpack.c.l.b16 %v992
      %v1003 = vpack.c.b16 %v999, %v998
      %v1004 = vpack.c.b16 %v1001, %v1000
      %v1005 = vpack.c.b16 %v1002, %v1002
      %vm1008 = vcmask 293888
      %v1009 = vsel %vm1008, %v973, 0
      %v1011 = vsel %vm1008, %v975, 0
      %v1013 = vsel %vm1008, %v977, 0
      %v1015 = vsel %vm1008, %v979, 0
      %v1017 = vsel %vm1008, %v981, 0
      %v1019 = vsel %vm1008, %v983, 0
      %v1021 = vsel %vm1008, %v985, 0
      %v1023 = vsel %vm1008, %v987, 0
      %vm1025 = vcmask 1041408
      %v1027 = vsel %vm1025, %v1005, 0
      %1029 = vmatprep.subr.bf16.mxu0 0
      %1030 = vmatpush1.bf16.msra.mxu0 0
      %1031 = vmatprep.subr.bf16.mxu0 0
      %1032 = vmatpush1.bf16.msra.mxu0 0
      %1033 = vmatprep.subr.bf16.mxu0 0
      %1034 = vmatpush1.bf16.msra.mxu0 0
      %1035 = vmatprep.subr.bf16.mxu0 0
      %1036 = vmatpush1.bf16.msra.mxu0 0
      %1037 = vmatprep.subr.bf16.mxu0 0
      %1038 = vmatpush1.bf16.msra.mxu0 0
      %1039 = vmatprep.subr.bf16.mxu0 0
      %1040 = vmatpush1.bf16.msra.mxu0 %v1027
      %1041 = vmatprep.subr.bf16.mxu0 0
      %1042 = vmatpush1.bf16.msra.mxu0 %v1004
      %1043 = vmatprep.subr.bf16.mxu0 0
      %1044 = vmatpush1.bf16.msra.mxu0 %v1003
      %1045 = vmatprep.subr.bf16.mxu0 0
      %1046 = vmatpush2.bf16.msra.mxu0 0
      %1047 = vmatprep.subr.bf16.mxu0 0
      %1048 = vmatpush2.bf16.msra.mxu0 0
      %1049 = vmatprep.subr.bf16.mxu0 0
      %1050 = vmatpush2.bf16.msra.mxu0 0
      %1051 = vmatprep.subr.bf16.mxu0 0
      %1052 = vmatpush2.bf16.msra.mxu0 0
      %1053 = vmatprep.subr.bf16.mxu0 0
      %1054 = vmatpush2.bf16.msra.mxu0 0
      %1055 = vmatprep.subr.bf16.mxu0 0
      %1056 = vmatpush2.bf16.msra.mxu0 0
      %1057 = vmatprep.subr.bf16.mxu0 0
      %1058 = vmatpush2.bf16.msra.mxu0 0
      %1059 = vmatprep.subr.bf16.mxu0 0
      %1060 = vmatpush2.bf16.msra.mxu0 0
      %1061 = vmatprep.mubr.bf16.mxu0 0
      %1062 = vmatmul.mubr.bf16.gmra.mxu0 %v1009
      %v1063 = vpop.f32.mrf.mxu0
      %v1064 = vadd.f32 0.0, %v1063
      %v1065 = vpop.f32.mrf.mxu0
      %v1066 = vpop.f32.mrf.mxu0
      %v1067 = vadd.f32 0.0, %v1066
      %v1068 = vpop.f32.mrf.mxu0
      %1069 = vmatprep.mubr.bf16.mxu0 0
      %1070 = vmatmul.mubr.bf16.gmra.mxu0 %v1011
      %v1071 = vpop.f32.mrf.mxu0
      %v1072 = vadd.f32 0.0, %v1071
      %v1073 = vpop.f32.mrf.mxu0
      %v1074 = vpop.f32.mrf.mxu0
      %v1075 = vadd.f32 0.0, %v1074
      %v1076 = vpop.f32.mrf.mxu0
      %1077 = vmatprep.mubr.bf16.mxu0 0
      %1078 = vmatmul.mubr.bf16.gmra.mxu0 %v1013
      %v1079 = vpop.f32.mrf.mxu0
      %v1080 = vadd.f32 0.0, %v1079
      %v1081 = vpop.f32.mrf.mxu0
      %v1082 = vpop.f32.mrf.mxu0
      %v1083 = vadd.f32 0.0, %v1082
      %v1084 = vpop.f32.mrf.mxu0
      %1085 = vmatprep.mubr.bf16.mxu0 0
      %1086 = vmatmul.mubr.bf16.gmra.mxu0 %v1015
      %v1087 = vpop.f32.mrf.mxu0
      %v1088 = vadd.f32 0.0, %v1087
      %v1089 = vpop.f32.mrf.mxu0
      %v1090 = vpop.f32.mrf.mxu0
      %v1091 = vadd.f32 0.0, %v1090
      %v1092 = vpop.f32.mrf.mxu0
      %1093 = vmatprep.mubr.bf16.mxu0 0
      %1094 = vmatmul.mubr.bf16.gmra.mxu0 %v1017
      %v1095 = vpop.f32.mrf.mxu0
      %v1096 = vadd.f32 0.0, %v1095
      %v1097 = vpop.f32.mrf.mxu0
      %v1098 = vpop.f32.mrf.mxu0
      %v1099 = vadd.f32 0.0, %v1098
      %v1100 = vpop.f32.mrf.mxu0
      %1101 = vmatprep.mubr.bf16.mxu0 0
      %1102 = vmatmul.mubr.bf16.gmra.mxu0 %v1019
      %v1103 = vpop.f32.mrf.mxu0
      %v1104 = vadd.f32 0.0, %v1103
      %v1105 = vpop.f32.mrf.mxu0
      %v1106 = vpop.f32.mrf.mxu0
      %v1107 = vadd.f32 0.0, %v1106
      %v1108 = vpop.f32.mrf.mxu0
      %1109 = vmatprep.mubr.bf16.mxu0 0
      %1110 = vmatmul.mubr.bf16.gmra.mxu0 %v1021
      %v1111 = vpop.f32.mrf.mxu0
      %v1112 = vadd.f32 0.0, %v1111
      %v1113 = vpop.f32.mrf.mxu0
      %v1114 = vpop.f32.mrf.mxu0
      %v1115 = vadd.f32 0.0, %v1114
      %v1116 = vpop.f32.mrf.mxu0
      %1117 = vmatprep.mubr.bf16.mxu0 0
      %1118 = vmatmul.mubr.bf16.gmra.mxu0 %v1023
      %v1119 = vpop.f32.mrf.mxu0
      %v1120 = vadd.f32 0.0, %v1119
      %v1121 = vpop.f32.mrf.mxu0
      %v1122 = vpop.f32.mrf.mxu0
      %v1123 = vadd.f32 0.0, %v1122
      %v1124 = vpop.f32.mrf.mxu0
      %1125 = vdwg.mxu0
      %p1126 = scmp.eq.s32.totalorder %s21, 0
      %p1127 = scmp.eq.s32.totalorder %s22, 0
      %p1128 = pnand %p1126, %p1127
      %p1129 = pneg %p1128
      // Predicated region
      $region37: #{resnet_block_forward.1} parent=35 // pred_check
        _
      $region38: #{resnet_block_forward.1} parent=35 // pred_check_branch
        %1131 = sbr.rel (%p1128) target = $region40
      $region39: #{resnet_block_forward.1} parent=35 // pred_region
        %vm1132 = vcmask 25600
        %1133 = vst.msk [vmem:[#allocation2] sm:$0x3] %vm1132, 0.0
      $region40: #{resnet_block_forward.1} parent=35 // pred_fallthru
        _
      // Predicated region
      $region41: #{resnet_block_forward.1} parent=35 // pred_check
        %p1134 = pneg %p1126
      $region42: #{resnet_block_forward.1} parent=35 // pred_check_branch
        %1136 = sbr.rel (%p1134) target = $region44
      $region43: #{resnet_block_forward.1} parent=35 // pred_region
        %v1137 = vld [vmem:[#allocation2] sm:$0x1]
        %v1138 = vsel %vm852, %v1064, 0.0
        %v1139 = vsel %vm852, %v1067, 0.0
        %v1140 = vadd.f32 %v1138, %v1139
        %v1141 = vsel %vm852, %v1072, 0.0
        %v1142 = vadd.f32 %v1140, %v1141
        %v1143 = vsel %vm852, %v1075, 0.0
        %v1144 = vadd.f32 %v1142, %v1143
        %v1145 = vsel %vm852, %v1080, 0.0
        %v1146 = vadd.f32 %v1144, %v1145
        %v1147 = vsel %vm852, %v1083, 0.0
        %v1148 = vadd.f32 %v1146, %v1147
        %v1149 = vsel %vm852, %v1088, 0.0
        %v1150 = vadd.f32 %v1148, %v1149
        %v1151 = vsel %vm852, %v1091, 0.0
        %v1152 = vadd.f32 %v1150, %v1151
        %v1153 = vsel %vm852, %v1096, 0.0
        %v1154 = vadd.f32 %v1152, %v1153
        %v1155 = vsel %vm852, %v1099, 0.0
        %v1156 = vadd.f32 %v1154, %v1155
        %v1157 = vsel %vm852, %v1104, 0.0
        %v1158 = vadd.f32 %v1156, %v1157
        %v1159 = vsel %vm852, %v1107, 0.0
        %v1160 = vadd.f32 %v1158, %v1159
        %v1161 = vsel %vm852, %v1112, 0.0
        %v1162 = vadd.f32 %v1160, %v1161
        %v1163 = vsel %vm852, %v1115, 0.0
        %v1164 = vadd.f32 %v1162, %v1163
        %v1165 = vsel %vm852, %v1120, 0.0
        %v1166 = vadd.f32 %v1164, %v1165
        %v1167 = vsel %vm852, %v1123, 0.0
        %v1168 = vadd.f32 %v1166, %v1167
        %v1169 = vrot.slane %v1168, 4
        %v1170 = vadd.f32 %v1168, %v1169
        %v1171 = vrot.slane %v1170, 2
        %v1172 = vadd.f32 %v1170, %v1171
        %v1173 = vrot.slane %v1172, 1
        %v1174 = vadd.f32 %v1172, %v1173
        %v1175 = vadd.f32 %v1137, %v1174
        %vm1176 = vcmask 24576
        %1177 = vst.msk [vmem:[#allocation2] sm:$0x1] %vm1176, %v1175
        %v1178 = vld [vmem:[#allocation2 + $0x1] sm:$0x1]
        %v1179 = vmul.f32 %v1064, %v1064
        %v1180 = vmul.f32 %v1067, %v1067
        %v1181 = vmul.f32 %v1072, %v1072
        %v1182 = vmul.f32 %v1075, %v1075
        %v1183 = vmul.f32 %v1080, %v1080
        %v1184 = vmul.f32 %v1083, %v1083
        %v1185 = vmul.f32 %v1088, %v1088
        %v1186 = vmul.f32 %v1091, %v1091
        %v1187 = vmul.f32 %v1096, %v1096
        %v1188 = vmul.f32 %v1099, %v1099
        %v1189 = vmul.f32 %v1104, %v1104
        %v1190 = vmul.f32 %v1107, %v1107
        %v1191 = vmul.f32 %v1112, %v1112
        %v1192 = vmul.f32 %v1115, %v1115
        %v1193 = vmul.f32 %v1120, %v1120
        %v1194 = vmul.f32 %v1123, %v1123
        %v1195 = vsel %vm852, %v1179, 0.0
        %v1196 = vsel %vm852, %v1180, 0.0
        %v1197 = vadd.f32 %v1195, %v1196
        %v1198 = vsel %vm852, %v1181, 0.0
        %v1199 = vadd.f32 %v1197, %v1198
        %v1200 = vsel %vm852, %v1182, 0.0
        %v1201 = vadd.f32 %v1199, %v1200
        %v1202 = vsel %vm852, %v1183, 0.0
        %v1203 = vadd.f32 %v1201, %v1202
        %v1204 = vsel %vm852, %v1184, 0.0
        %v1205 = vadd.f32 %v1203, %v1204
        %v1206 = vsel %vm852, %v1185, 0.0
        %v1207 = vadd.f32 %v1205, %v1206
        %v1208 = vsel %vm852, %v1186, 0.0
        %v1209 = vadd.f32 %v1207, %v1208
        %v1210 = vsel %vm852, %v1187, 0.0
        %v1211 = vadd.f32 %v1209, %v1210
        %v1212 = vsel %vm852, %v1188, 0.0
        %v1213 = vadd.f32 %v1211, %v1212
        %v1214 = vsel %vm852, %v1189, 0.0
        %v1215 = vadd.f32 %v1213, %v1214
        %v1216 = vsel %vm852, %v1190, 0.0
        %v1217 = vadd.f32 %v1215, %v1216
        %v1218 = vsel %vm852, %v1191, 0.0
        %v1219 = vadd.f32 %v1217, %v1218
        %v1220 = vsel %vm852, %v1192, 0.0
        %v1221 = vadd.f32 %v1219, %v1220
        %v1222 = vsel %vm852, %v1193, 0.0
        %v1223 = vadd.f32 %v1221, %v1222
        %v1224 = vsel %vm852, %v1194, 0.0
        %v1225 = vadd.f32 %v1223, %v1224
        %v1226 = vrot.slane %v1225, 4
        %v1227 = vadd.f32 %v1225, %v1226
        %v1228 = vrot.slane %v1227, 2
        %v1229 = vadd.f32 %v1227, %v1228
        %v1230 = vrot.slane %v1229, 1
        %v1231 = vadd.f32 %v1229, %v1230
        %v1232 = vadd.f32 %v1178, %v1231
        %1233 = vst.msk [vmem:[#allocation2 + $0x1] sm:$0x1] %vm1176, %v1232
      $region44: #{resnet_block_forward.1} parent=35 // pred_fallthru
        _
      %p1234 = scmp.eq.s32.totalorder %s21, 1
      // Predicated region
      $region45: #{resnet_block_forward.1} parent=35 // pred_check
        %p1235 = pneg %p1234
      $region46: #{resnet_block_forward.1} parent=35 // pred_check_branch
        %1237 = sbr.rel (%p1235) target = $region48
      $region47: #{resnet_block_forward.1} parent=35 // pred_region
        %v1238 = vld [vmem:[#allocation2] sm:$0x1]
        %v1239 = vmul.f32 %v1238, 0.00390625
        %v1240 = vld [vmem:[#allocation2 + $0x1] sm:$0x1]
        %v1241 = vmul.f32 %v1240, 0.00390625
        %v1242 = vmul.f32 %v1239, %v1239
        %v1243 = vsub.f32 %v1241, %v1242
        %v1244 = vadd.f32 %v1243, 1e-05
        %v1245 = vrsqrt.pop %v1244
        %v1246 = vlaneseq
        %v1247 = vshrl.u32 %v1246, 7
        %v1248 = vsub.s32 0, %v1247
        %v1249 = vrot.slane %v1239, %v1248
        %v1250 = vsub.f32 %v1064, %v1249
        %v1251 = vsub.f32 %v1067, %v1249
        %v1252 = vsub.f32 %v1072, %v1249
        %v1253 = vsub.f32 %v1075, %v1249
        %v1254 = vsub.f32 %v1080, %v1249
        %v1255 = vsub.f32 %v1083, %v1249
        %v1256 = vsub.f32 %v1088, %v1249
        %v1257 = vsub.f32 %v1091, %v1249
        %v1258 = vsub.f32 %v1096, %v1249
        %v1259 = vsub.f32 %v1099, %v1249
        %v1260 = vsub.f32 %v1104, %v1249
        %v1261 = vsub.f32 %v1107, %v1249
        %v1262 = vsub.f32 %v1112, %v1249
        %v1263 = vsub.f32 %v1115, %v1249
        %v1264 = vsub.f32 %v1120, %v1249
        %v1265 = vsub.f32 %v1123, %v1249
        %v1266 = vlaneseq
        %v1267 = vshrl.u32 %v1266, 7
        %v1268 = vsub.s32 0, %v1267
        %v1269 = vrot.slane %v1245, %v1268
        %v1270 = vmul.f32 %v1250, %v1269
        %v1271 = vmul.f32 %v1251, %v1269
        %v1272 = vmul.f32 %v1252, %v1269
        %v1273 = vmul.f32 %v1253, %v1269
        %v1274 = vmul.f32 %v1254, %v1269
        %v1275 = vmul.f32 %v1255, %v1269
        %v1276 = vmul.f32 %v1256, %v1269
        %v1277 = vmul.f32 %v1257, %v1269
        %v1278 = vmul.f32 %v1258, %v1269
        %v1279 = vmul.f32 %v1259, %v1269
        %v1280 = vmul.f32 %v1260, %v1269
        %v1281 = vmul.f32 %v1261, %v1269
        %v1282 = vmul.f32 %v1262, %v1269
        %v1283 = vmul.f32 %v1263, %v1269
        %v1284 = vmul.f32 %v1264, %v1269
        %v1285 = vmul.f32 %v1265, %v1269
        %v1286 = vld [vmem:[%s329] sm:$0xff]
        %v1287 = vld [vmem:[%s329 + $0x8] sm:$0xff]
        %v1288 = vld [vmem:[%s329 + $0x10] sm:$0xff]
        %v1289 = vld [vmem:[%s329 + $0x18] sm:$0xff]
        %v1290 = vld [vmem:[%s329 + $0x20] sm:$0xff]
        %v1291 = vld [vmem:[%s329 + $0x28] sm:$0xff]
        %v1292 = vld [vmem:[%s329 + $0x30] sm:$0xff]
        %v1293 = vld [vmem:[%s329 + $0x38] sm:$0xff]
        %v1294 = vld [vmem:[%s329 + $0x40] sm:$0xff]
        %v1295 = vld [vmem:[%s329 + $0x48] sm:$0xff]
        %v1296 = vld [vmem:[%s329 + $0x50] sm:$0xff]
        %v1297 = vld [vmem:[%s329 + $0x58] sm:$0xff]
        %v1298 = vld [vmem:[%s329 + $0x60] sm:$0xff]
        %v1299 = vld [vmem:[%s329 + $0x68] sm:$0xff]
        %v1300 = vld [vmem:[%s329 + $0x70] sm:$0xff]
        %v1301 = vld [vmem:[%s329 + $0x78] sm:$0xff]
        %v1302 = vadd.f32 %v1286, %v1270
        %v1303 = vadd.f32 %v1287, %v1271
        %v1304 = vadd.f32 %v1288, %v1272
        %v1305 = vadd.f32 %v1289, %v1273
        %v1306 = vadd.f32 %v1290, %v1274
        %v1307 = vadd.f32 %v1291, %v1275
        %v1308 = vadd.f32 %v1292, %v1276
        %v1309 = vadd.f32 %v1293, %v1277
        %v1310 = vadd.f32 %v1294, %v1278
        %v1311 = vadd.f32 %v1295, %v1279
        %v1312 = vadd.f32 %v1296, %v1280
        %v1313 = vadd.f32 %v1297, %v1281
        %v1314 = vadd.f32 %v1298, %v1282
        %v1315 = vadd.f32 %v1299, %v1283
        %v1316 = vadd.f32 %v1300, %v1284
        %v1317 = vadd.f32 %v1301, %v1285
        %1318 = vst.msk [vmem:[%s375] sm:$0xff] %vm852, %v1302
        %1319 = vst.msk [vmem:[%s375 + $0x8] sm:$0xff] %vm852, %v1303
        %1320 = vst.msk [vmem:[%s375 + $0x10] sm:$0xff] %vm852, %v1304
        %1321 = vst.msk [vmem:[%s375 + $0x18] sm:$0xff] %vm852, %v1305
        %1322 = vst.msk [vmem:[%s375 + $0x20] sm:$0xff] %vm852, %v1306
        %1323 = vst.msk [vmem:[%s375 + $0x28] sm:$0xff] %vm852, %v1307
        %1324 = vst.msk [vmem:[%s375 + $0x30] sm:$0xff] %vm852, %v1308
        %1325 = vst.msk [vmem:[%s375 + $0x38] sm:$0xff] %vm852, %v1309
        %1326 = vst.msk [vmem:[%s375 + $0x40] sm:$0xff] %vm852, %v1310
        %1327 = vst.msk [vmem:[%s375 + $0x48] sm:$0xff] %vm852, %v1311
        %1328 = vst.msk [vmem:[%s375 + $0x50] sm:$0xff] %vm852, %v1312
        %1329 = vst.msk [vmem:[%s375 + $0x58] sm:$0xff] %vm852, %v1313
        %1330 = vst.msk [vmem:[%s375 + $0x60] sm:$0xff] %vm852, %v1314
        %1331 = vst.msk [vmem:[%s375 + $0x68] sm:$0xff] %vm852, %v1315
        %1332 = vst.msk [vmem:[%s375 + $0x70] sm:$0xff] %vm852, %v1316
        %1333 = vst.msk [vmem:[%s375 + $0x78] sm:$0xff] %vm852, %v1317
      $region48: #{resnet_block_forward.1} parent=35 // pred_fallthru
        _
      %s1334 = smul.u32 %s22, %s21
      %s1335 = smul.u32 8, %s1334
      %p1336 = scmp.lt.s32.totalorder %s20, 1
      %s1337 = scalar_select %p1336, %s20, 1
      %p1338 = scmp.lt.s32.totalorder %s1335, 15
      %s1339 = scalar_select %p1338, %s1335, 15
      %s1340 = smul.addr %s1339, 2
      %s1341 = smul.addr %s1337, 32
      %s1342 = sadd.s32 %s1340, %s1341
      %s1343 = smul.addr %s1342, 8
      %s1344 = scalar_lea.vmem %s4, %s1343
      // Predicated region
      $region49: #{resnet_block_forward.1} parent=35 // pred_check
        %p1345 = pneg %p177
      $region50: #{resnet_block_forward.1} parent=35 // pred_check_branch
        %1347 = sbr.rel (%p1345) target = $region52
      $region51: #{resnet_block_forward.1} parent=35 // pred_region
        %s1348 = smul.u32 %s22, %s21
        %s1349 = smul.u32 8, %s1348
      $region52: #{resnet_block_forward.1} parent=35 // pred_fallthru
        _
    $region36: #{resnet_block_forward.1} parent=5 // pred_fallthru
      _
    %p1350 = scmp.le.s32.totalorder 2, %s10
    // Predicated region
    $region53: #{resnet_block_forward.1} parent=5 // pred_check
      %p1351 = pneg %p1350
    $region54: #{resnet_block_forward.1} parent=5 // pred_check_branch
      %1353 = sbr.rel (%p1351) target = $region56
    $region55: #{resnet_block_forward.1} parent=5 // pred_region
      %s1354 = ssub.s32 %s10, 2
      // Predicated region
      $region57: #{resnet_block_forward.1} parent=55 // pred_check
        %p1355 = pneg %p183
      $region58: #{resnet_block_forward.1} parent=55 // pred_check_branch
        %1357 = sbr.rel (%p1355) target = $region60
      $region59: #{resnet_block_forward.1} parent=55 // pred_region
        %s1358 = smul.u32 %s25, %s24
        %s1359 = smul.u32 8, %s1358
        %p1360 = scmp.lt.s32.totalorder %s23, 1
        %s1361 = scalar_select %p1360, %s23, 1
        %p1362 = scmp.lt.s32.totalorder %s1359, 15
        %s1363 = scalar_select %p1362, %s1359, 15
        %s1364 = smul.addr %s1363, 2
        %s1365 = smul.addr %s1361, 32
        %s1366 = sadd.s32 %s1364, %s1365
        %s1367 = smul.addr %s1366, 8
        %s1368 = scalar_lea.vmem %s4, %s1367
      $region60: #{resnet_block_forward.1} parent=55 // pred_fallthru
        _
    $region56: #{resnet_block_forward.1} parent=5 // pred_fallthru
      _
  $region6: #{resnet_block_forward.1} parent=0 // loop_footer
    %s14 = sadd.s32 1, %s10
  $region7: #{resnet_block_forward.1} parent=0 // loop_footer_branch
    %9 = sbr.rel target = $region3
  $region8: #{resnet_block_forward.1} parent=0 // loop_exit
    _

</llo_original>
